<compile_context>
chip_gen: v6e
topology: v6e:2x2x1
jax: 0.10.0
libtpu: 0.0.40
codegen_flags: <defaults>
</compile_context>

<pallas_src>
import functools

import jax
import jax.numpy as jnp
from jax.experimental import pallas as pl
from jax.experimental.pallas import tpu as pltpu

# ---- static model config (small, consistent with the module) ----
NUM_EMBEDDINGS = 64     # num_embeddings (V)
EMB_DIM        = 32     # embedding_dim == dense_input_size == dense_output_size (D)
NUM_LAYERS     = 10     # len(self.dense)
BATCH          = 2      # B
BAG            = 8      # entries per bag (2-D EmbeddingBag input)


def _round_up(x, m):
    return ((x + m - 1) // m) * m


def dummy_model_kernel(idx_ref, a_ref, o_ref):
    """Fully fused forward: softmax(counts @ A) for one batch tile.

    idx_ref: [Bt, bag] int32   (one bag per row)
    a_ref:   [V, D]    float32 ((table/bag) @ W_eff + b_eff/bag, pre-folded in wrapper)
    o_ref:   [Bt, D]   float32
    """
    bt, bag = idx_ref.shape
    v = a_ref.shape[0]
    idx = idx_ref[...]                                              # [Bt, bag]

    # Bag-count matrix, lane-major 2-D layout: counts[b, v] = #{ j : idx[b, j] == v }.
    # Short unrolled VPU compare/add loop, accumulated in int32; single cast at the end.
    iota_v = jax.lax.broadcasted_iota(jnp.int32, (bt, v), 1)        # [Bt, V]
    counts = (iota_v == idx[:, 0:1]).astype(jnp.int32)
    for j in range(1, bag):
        counts = counts + (iota_v == idx[:, j:j + 1]).astype(jnp.int32)
    counts_f = counts.astype(jnp.float32)                           # one convert

    # One MXU op = EmbeddingBag(mean) + all 10 Linear layers + bias (all pre-folded).
    h = jnp.dot(counts_f, a_ref[...], preferred_element_type=jnp.float32)   # [Bt, D]

    # softmax over dim=1 (feature axis); reciprocal rides the EUP slot.
    m = jnp.max(h, axis=1, keepdims=True)
    e = jnp.exp(h - m)
    denom = jnp.sum(e, axis=1, keepdims=True)
    o_ref[...] = e * pl.reciprocal(denom, approx=False)


@functools.partial(jax.jit, static_argnames=("block_b",))
def dummy_model_forward(x_idx, emb_table, weights, biases, *, block_b=2048):
    """x_idx: [B, bag] int32; returns [B, D] float32 softmax probabilities."""
    B, bag = x_idx.shape
    V, D = emb_table.shape
    L = weights.shape[0]

    # --- algebraic fold (traced once under jit): 10 Linears -> 1 affine map ---
    #   h @ W1 + b1 ... @ W10 + b10  ==  h @ W_eff + b_eff
    w_eff = weights[0]
    b_eff = biases[0]
    for l in range(1, L):
        b_eff = b_eff @ weights[l] + biases[l]
        w_eff = w_eff @ weights[l]
    # Fold mean-pool (1/bag), embedding table, AND bias into one matrix:
    #   model(x) = softmax(counts(x) @ A'),  A' = (table @ W_eff + b_eff) / bag
    # (valid because every counts row sums exactly to `bag`, padded rows included).
    a_mat = (emb_table @ w_eff + b_eff[None, :]) * (1.0 / bag)       # [V, D] f32

    # --- tile selection: one grid step unless the batch is genuinely large ---
    bt_full = _round_up(B, 8)
    if bt_full <= block_b:
        bt = bt_full                          # single step: best on v5e/v6e, small-B v7x
    else:
        # Large batch: a few big tiles (<= block_b rows); "parallel" lets v7x's
        # second TensorCore take half of them.
        bt = min(block_b, _round_up(-(-B // 2), 8))
    b_pad = _round_up(B, bt)
    if b_pad != B:
        x_idx = jnp.pad(x_idx, ((0, b_pad - B), (0, 0)))             # pad bags (index 0)

    out = pl.pallas_call(
        dummy_model_kernel,
        out_shape=jax.ShapeDtypeStruct((b_pad, D), jnp.float32),
        grid_spec=pltpu.PrefetchScalarGridSpec(
            num_scalar_prefetch=0,
            grid=(b_pad // bt,),
            in_specs=[
                pl.BlockSpec((bt, bag), lambda i: (i, 0)),   # per-tile bag indices
                pl.BlockSpec((V, D),   lambda i: (0, 0)),    # folded (table@W_eff)+bias, VMEM-resident
            ],
            out_specs=pl.BlockSpec((bt, D), lambda i: (i, 0)),
        ),
        compiler_params=pltpu.CompilerParams(
            dimension_semantics=("parallel",)),               # only >1 step for large B
    )(x_idx, a_mat)
    return out[:B]


def _reference_forward(x_idx, emb_table, weights, biases):
    """Pure-JAX reference mirroring the PyTorch forward layer-by-layer."""
    emb = jnp.take(emb_table, x_idx, axis=0)        # [B, bag, D]
    h = jnp.mean(emb, axis=1)                       # EmbeddingBag mean pooling
    for l in range(weights.shape[0]):
        h = h @ weights[l] + biases[l]
    return jax.nn.softmax(h, axis=1)


if __name__ == "__main__":
    key = jax.random.PRNGKey(0)
    k_idx, k_tab, k_w, k_b, k_big = jax.random.split(key, 5)

    # deterministic synthetic parameters (shapes from __init__)
    emb_table = jax.random.normal(k_tab, (NUM_EMBEDDINGS, EMB_DIM), jnp.float32) * 0.1
    # PyTorch Linear stores W as [out, in]; pre-transpose to [in, out] (glue).
    w_torch_layout = jax.random.normal(
        k_w, (NUM_LAYERS, EMB_DIM, EMB_DIM), jnp.float32) * 0.1
    weights = jnp.transpose(w_torch_layout, (0, 2, 1))               # [L, D_in, D_out]
    biases = jax.random.normal(k_b, (NUM_LAYERS, EMB_DIM), jnp.float32) * 0.1

    # example input: 2-D index tensor -> each row is a fixed-size bag (EmbeddingBag 2-D mode)
    x = jax.random.randint(k_idx, (BATCH, BAG), 0, NUM_EMBEDDINGS, dtype=jnp.int32)

    out = dummy_model_forward(x, emb_table, weights, biases)
    out = jax.block_until_ready(out)

    ref = _reference_forward(x, emb_table, weights, biases)
    assert out.shape == (BATCH, EMB_DIM)
    assert jnp.allclose(out, ref, atol=1e-3), "mismatch vs. pure-JAX reference"
    assert jnp.allclose(jnp.sum(out, axis=1), 1.0, atol=1e-3)

    # also exercise the multi-tile batched grid path (B=256, block_b=128 -> 2 tiles)
    xb = jax.random.randint(k_big, (256, BAG), 0, NUM_EMBEDDINGS, dtype=jnp.int32)
    outb = jax.block_until_ready(
        dummy_model_forward(xb, emb_table, weights, biases, block_b=128))
    refb = _reference_forward(xb, emb_table, weights, biases)
    assert outb.shape == (256, EMB_DIM)
    assert jnp.allclose(outb, refb, atol=1e-3), "batched mismatch vs. reference"

    print("KERNEL_OK")
</pallas_src>

<mosaic_0001>
module attributes {stable_mosaic.version = 11 : i64} {
  func.func @dummy_model_kernel(%arg0: i32, %arg1: memref<8x8xi32, #tpu.memory_space<vmem>>, %arg2: memref<64x32xf32, #tpu.memory_space<vmem>>, %arg3: memref<8x32xf32, #tpu.memory_space<vmem>>) attributes {dimension_semantics = [#tpu.dimension_semantics<parallel>], iteration_bounds = array<i64: 1>, scalar_prefetch = 0 : i64, scratch_operands = 0 : i64, tpu.core_type = #tpu.core_type<tc>, window_params = [{transform_indices = @transform_0, window_bounds = array<i64: 8, 8>}, {pipeline_mode = #tpu.pipeline_mode<synchronous>, transform_indices = @transform_1, window_bounds = array<i64: 64, 32>}, {transform_indices = @transform_2, window_bounds = array<i64: 8, 32>}]} {
    %c0 = arith.constant 0 : index
    %c0_0 = arith.constant 0 : index
    %0 = vector.load %arg1[%c0, %c0_0] : memref<8x8xi32, #tpu.memory_space<vmem>>, vector<8x8xi32>
    %1 = tpu.iota {dimensions = array<i32: 1>} : vector<8x64xi32>
    %2 = vector.extract_strided_slice %0 {offsets = [0, 0], sizes = [8, 1], strides = [1, 1]} : vector<8x8xi32> to vector<8x1xi32>
    %3 = vector.broadcast %2 : vector<8x1xi32> to vector<8x64xi32>
    %4 = arith.cmpi eq, %1, %3 : vector<8x64xi32>
    %5 = arith.extui %4 : vector<8x64xi1> to vector<8x64xi32>
    %6 = vector.extract_strided_slice %0 {offsets = [0, 1], sizes = [8, 1], strides = [1, 1]} : vector<8x8xi32> to vector<8x1xi32>
    %7 = vector.broadcast %6 : vector<8x1xi32> to vector<8x64xi32>
    %8 = arith.cmpi eq, %1, %7 : vector<8x64xi32>
    %9 = arith.extui %8 : vector<8x64xi1> to vector<8x64xi32>
    %10 = arith.addi %5, %9 : vector<8x64xi32>
    %11 = vector.extract_strided_slice %0 {offsets = [0, 2], sizes = [8, 1], strides = [1, 1]} : vector<8x8xi32> to vector<8x1xi32>
    %12 = vector.broadcast %11 : vector<8x1xi32> to vector<8x64xi32>
    %13 = arith.cmpi eq, %1, %12 : vector<8x64xi32>
    %14 = arith.extui %13 : vector<8x64xi1> to vector<8x64xi32>
    %15 = arith.addi %10, %14 : vector<8x64xi32>
    %16 = vector.extract_strided_slice %0 {offsets = [0, 3], sizes = [8, 1], strides = [1, 1]} : vector<8x8xi32> to vector<8x1xi32>
    %17 = vector.broadcast %16 : vector<8x1xi32> to vector<8x64xi32>
    %18 = arith.cmpi eq, %1, %17 : vector<8x64xi32>
    %19 = arith.extui %18 : vector<8x64xi1> to vector<8x64xi32>
    %20 = arith.addi %15, %19 : vector<8x64xi32>
    %21 = vector.extract_strided_slice %0 {offsets = [0, 4], sizes = [8, 1], strides = [1, 1]} : vector<8x8xi32> to vector<8x1xi32>
    %22 = vector.broadcast %21 : vector<8x1xi32> to vector<8x64xi32>
    %23 = arith.cmpi eq, %1, %22 : vector<8x64xi32>
    %24 = arith.extui %23 : vector<8x64xi1> to vector<8x64xi32>
    %25 = arith.addi %20, %24 : vector<8x64xi32>
    %26 = vector.extract_strided_slice %0 {offsets = [0, 5], sizes = [8, 1], strides = [1, 1]} : vector<8x8xi32> to vector<8x1xi32>
    %27 = vector.broadcast %26 : vector<8x1xi32> to vector<8x64xi32>
    %28 = arith.cmpi eq, %1, %27 : vector<8x64xi32>
    %29 = arith.extui %28 : vector<8x64xi1> to vector<8x64xi32>
    %30 = arith.addi %25, %29 : vector<8x64xi32>
    %31 = vector.extract_strided_slice %0 {offsets = [0, 6], sizes = [8, 1], strides = [1, 1]} : vector<8x8xi32> to vector<8x1xi32>
    %32 = vector.broadcast %31 : vector<8x1xi32> to vector<8x64xi32>
    %33 = arith.cmpi eq, %1, %32 : vector<8x64xi32>
    %34 = arith.extui %33 : vector<8x64xi1> to vector<8x64xi32>
    %35 = arith.addi %30, %34 : vector<8x64xi32>
    %36 = vector.extract_strided_slice %0 {offsets = [0, 7], sizes = [8, 1], strides = [1, 1]} : vector<8x8xi32> to vector<8x1xi32>
    %37 = vector.broadcast %36 : vector<8x1xi32> to vector<8x64xi32>
    %38 = arith.cmpi eq, %1, %37 : vector<8x64xi32>
    %39 = arith.extui %38 : vector<8x64xi1> to vector<8x64xi32>
    %40 = arith.addi %35, %39 : vector<8x64xi32>
    %41 = arith.sitofp %40 : vector<8x64xi32> to vector<8x64xf32>
    %c0_1 = arith.constant 0 : index
    %c0_2 = arith.constant 0 : index
    %42 = vector.load %arg2[%c0_1, %c0_2] : memref<64x32xf32, #tpu.memory_space<vmem>>, vector<64x32xf32>
    %cst = arith.constant dense<0.000000e+00> : vector<8x32xf32>
    %43 = tpu.matmul %41, %42, %cst {dimension_numbers = #tpu.dot_dimension_numbers<[1], [0], [0], [1], [0, 0, 1, 1], [], []>} : vector<8x64xf32>, vector<64x32xf32>, vector<8x32xf32> -> vector<8x32xf32>
    %cst_3 = arith.constant dense<0xFF800000> : vector<8xf32>
    %44 = vector.multi_reduction <maximumf>, %43, %cst_3 [1] : vector<8x32xf32> to vector<8xf32>
    %45 = vector.shape_cast %44 : vector<8xf32> to vector<8x1xf32>
    %46 = vector.broadcast %45 : vector<8x1xf32> to vector<8x32xf32>
    %47 = arith.subf %43, %46 : vector<8x32xf32>
    %48 = math.exp %47 : vector<8x32xf32>
    %cst_4 = arith.constant dense<0.000000e+00> : vector<8xf32>
    %49 = vector.multi_reduction <add>, %48, %cst_4 [1] : vector<8x32xf32> to vector<8xf32>
    %50 = vector.shape_cast %49 : vector<8xf32> to vector<8x1xf32>
    %51 = tpu.reciprocal %50 : vector<8x1xf32> -> vector<8x1xf32>
    %52 = vector.broadcast %51 : vector<8x1xf32> to vector<8x32xf32>
    %53 = arith.mulf %48, %52 : vector<8x32xf32>
    %c0_5 = arith.constant 0 : index
    %c0_6 = arith.constant 0 : index
    %54 = vector.load %arg3[%c0_5, %c0_6] : memref<8x32xf32, #tpu.memory_space<vmem>>, vector<8x32xf32>
    tpu.vector_store %arg3[%c0_5, %c0_6], %53 {strides = array<i32>} : memref<8x32xf32, #tpu.memory_space<vmem>>, vector<8x32xf32>,
    return
  }
  func.func @transform_0(%arg0: i32) -> (i32, i32) {
    %c0_i32 = arith.constant 0 : i32
    %c0_i32_0 = arith.constant 0 : i32
    return %arg0, %c0_i32 : i32, i32
  }
  func.func @transform_1(%arg0: i32) -> (i32, i32) {
    %c0_i32 = arith.constant 0 : i32
    %c0_i32_0 = arith.constant 0 : i32
    %c0_i32_1 = arith.constant 0 : i32
    return %c0_i32, %c0_i32_0 : i32, i32
  }
  func.func @transform_2(%arg0: i32) -> (i32, i32) {
    %c0_i32 = arith.constant 0 : i32
    %c0_i32_0 = arith.constant 0 : i32
    return %arg0, %c0_i32 : i32, i32
  }
}

</mosaic_0001>

<llo_original>
// kernel: dummy_model_forward.1
$region0: #{dummy_model_forward.1}
  #allocation0 [shape = 'u32[]', space=smem, size = 0x4, offset = 0x4, fixed_abs, tag = 'smem constant byte address 0x4 - core index']
  #allocation1 [shape = 'u32[144,128]{1,0:T(1,128)}', space=vmem, size = 0x12000, scoped, tag = 'internal scratch']
  %s0 = inlined_call_operand.vmem [shape: s32[8,8], index: 0, kind: input, shape index: {}]
  %s1 = inlined_call_operand.vmem [shape: f32[64,32], index: 1, kind: input, shape index: {}]
  %s2 = inlined_call_operand.vmem [shape: f32[8,32], index: 2, kind: output, shape index: {}]
  %s3 = sld [smem:[#allocation0]]
  $region18: #{dummy_model_forward.1} parent=0
    _
  %s5 = ssub.s32 1, %s3
  %s6 = scalar_select 0, %s5, %s3
  // Predicated region
  $region2: #{dummy_model_forward.1} parent=0 // pred_check
    _
  $region3: #{dummy_model_forward.1} parent=0 // pred_check_branch
    %8 = sbr.rel (0) target = $region5
  $region4: #{dummy_model_forward.1} parent=0 // pred_region
    _
  $region5: #{dummy_model_forward.1} parent=0 // pred_fallthru
    _
  // Predicated region
  $region6: #{dummy_model_forward.1} parent=0 // pred_check
    _
  $region7: #{dummy_model_forward.1} parent=0 // pred_check_branch
    %10 = sbr.rel (0) target = $region9
  $region8: #{dummy_model_forward.1} parent=0 // pred_region
    _
  $region9: #{dummy_model_forward.1} parent=0 // pred_fallthru
    _
  %v11 = vld [vmem:[%s0] sm:$0xff]
  %v12 = vlaneseq
  %v13 = vand.u32 %v12, 127
  %14 = vset.pattern.permute.xlu0 0
  %15 = vperm.xlu0 %14, %v11
  %v16 = vpop.permute.xlu0 %15
  %vm17 = vcmp.eq.s32.totalorder %v13, %v16
  %v18 = vsel %vm17, 1, 0
  %19 = vset.pattern.permute.xlu0 1
  %20 = vperm.xlu0 %19, %v11
  %v21 = vpop.permute.xlu0 %20
  %vm22 = vcmp.eq.s32.totalorder %v13, %v21
  %v23 = vsel %vm22, 1, 0
  %v24 = vadd.s32 %v18, %v23
  %25 = vset.pattern.permute.xlu0 2
  %26 = vperm.xlu0 %25, %v11
  %v27 = vpop.permute.xlu0 %26
  %vm28 = vcmp.eq.s32.totalorder %v13, %v27
  %v29 = vsel %vm28, 1, 0
  %v30 = vadd.s32 %v24, %v29
  %31 = vset.pattern.permute.xlu0 3
  %32 = vperm.xlu0 %31, %v11
  %v33 = vpop.permute.xlu0 %32
  %vm34 = vcmp.eq.s32.totalorder %v13, %v33
  %v35 = vsel %vm34, 1, 0
  %v36 = vadd.s32 %v30, %v35
  %37 = vset.pattern.permute.xlu0 4
  %38 = vperm.xlu0 %37, %v11
  %v39 = vpop.permute.xlu0 %38
  %vm40 = vcmp.eq.s32.totalorder %v13, %v39
  %v41 = vsel %vm40, 1, 0
  %v42 = vadd.s32 %v36, %v41
  %43 = vset.pattern.permute.xlu0 5
  %44 = vperm.xlu0 %43, %v11
  %v45 = vpop.permute.xlu0 %44
  %vm46 = vcmp.eq.s32.totalorder %v13, %v45
  %v47 = vsel %vm46, 1, 0
  %v48 = vadd.s32 %v42, %v47
  %49 = vset.pattern.permute.xlu0 6
  %50 = vperm.xlu0 %49, %v11
  %v51 = vpop.permute.xlu0 %50
  %vm52 = vcmp.eq.s32.totalorder %v13, %v51
  %v53 = vsel %vm52, 1, 0
  %v54 = vadd.s32 %v48, %v53
  %55 = vset.pattern.permute.xlu0 7
  %56 = vperm.xlu0 %55, %v11
  %v57 = vpop.permute.xlu0 %56
  %vm58 = vcmp.eq.s32.totalorder %v13, %v57
  %v59 = vsel %vm58, 1, 0
  %v60 = vadd.s32 %v54, %v59
  %v61 = vcvt.s32.f32 %v60
  %v62 = vld [vmem:[%s1] sm:$0xff]
  %v63 = vld [vmem:[%s1 + $0x8] sm:$0xff]
  %v64 = vld [vmem:[%s1 + $0x10] sm:$0xff]
  %v65 = vld [vmem:[%s1 + $0x18] sm:$0xff]
  %v66 = vld [vmem:[%s1 + $0x20] sm:$0xff]
  %v67 = vld [vmem:[%s1 + $0x28] sm:$0xff]
  %v68 = vld [vmem:[%s1 + $0x30] sm:$0xff]
  %v69 = vld [vmem:[%s1 + $0x38] sm:$0xff]
  %vm70 = vcmask 523264
  %v72 = vsel %vm70, %v61, 0
  %74 = vmatprep.subr.mxu0 0.0
  %75 = vmatpush1.msra.mxu0 0.0
  %76 = vmatprep.subr.mxu0 0.0
  %77 = vmatpush1.msra.mxu0 0.0
  %78 = vmatprep.subr.mxu0 0.0
  %79 = vmatpush1.msra.mxu0 0.0
  %80 = vmatprep.subr.mxu0 0.0
  %81 = vmatpush1.msra.mxu0 0.0
  %82 = vmatprep.subr.mxu0 0.0
  %83 = vmatpush1.msra.mxu0 0.0
  %84 = vmatprep.subr.mxu0 0.0
  %85 = vmatpush1.msra.mxu0 0.0
  %86 = vmatprep.subr.mxu0 0.0
  %87 = vmatpush1.msra.mxu0 0.0
  %88 = vmatprep.subr.mxu0 0.0
  %89 = vmatpush1.msra.mxu0 0.0
  %90 = vmatprep.subr.mxu0 0.0
  %91 = vmatpush1.msra.mxu0 %v69
  %92 = vmatprep.subr.mxu0 0.0
  %93 = vmatpush1.msra.mxu0 %v68
  %94 = vmatprep.subr.mxu0 0.0
  %95 = vmatpush1.msra.mxu0 %v67
  %96 = vmatprep.subr.mxu0 0.0
  %97 = vmatpush1.msra.mxu0 %v66
  %98 = vmatprep.subr.mxu0 0.0
  %99 = vmatpush1.msra.mxu0 %v65
  %100 = vmatprep.subr.mxu0 0.0
  %101 = vmatpush1.msra.mxu0 %v64
  %102 = vmatprep.subr.mxu0 0.0
  %103 = vmatpush1.msra.mxu0 %v63
  %104 = vmatprep.subr.mxu0 0.0
  %105 = vmatpush1.msra.mxu0 %v62
  %106 = vmatprep.subr.mxu0 0.0
  %107 = vmatpush2.msra.mxu0 0.0
  %108 = vmatprep.subr.mxu0 0.0
  %109 = vmatpush2.msra.mxu0 0.0
  %110 = vmatprep.subr.mxu0 0.0
  %111 = vmatpush2.msra.mxu0 0.0
  %112 = vmatprep.subr.mxu0 0.0
  %113 = vmatpush2.msra.mxu0 0.0
  %114 = vmatprep.subr.mxu0 0.0
  %115 = vmatpush2.msra.mxu0 0.0
  %116 = vmatprep.subr.mxu0 0.0
  %117 = vmatpush2.msra.mxu0 0.0
  %118 = vmatprep.subr.mxu0 0.0
  %119 = vmatpush2.msra.mxu0 0.0
  %120 = vmatprep.subr.mxu0 0.0
  %121 = vmatpush2.msra.mxu0 0.0
  %122 = vmatprep.subr.mxu0 0.0
  %123 = vmatpush2.msra.mxu0 0.0
  %124 = vmatprep.subr.mxu0 0.0
  %125 = vmatpush2.msra.mxu0 0.0
  %126 = vmatprep.subr.mxu0 0.0
  %127 = vmatpush2.msra.mxu0 0.0
  %128 = vmatprep.subr.mxu0 0.0
  %129 = vmatpush2.msra.mxu0 0.0
  %130 = vmatprep.subr.mxu0 0.0
  %131 = vmatpush2.msra.mxu0 0.0
  %132 = vmatprep.subr.mxu0 0.0
  %133 = vmatpush2.msra.mxu0 0.0
  %134 = vmatprep.subr.mxu0 0.0
  %135 = vmatpush2.msra.mxu0 0.0
  %136 = vmatprep.subr.mxu0 0.0
  %137 = vmatpush2.msra.mxu0 0.0
  %138 = vmatprep.mubr.f32.mxu0 0.0
  %139 = vmatmul.mubr.f32.gmra.mxu0 %v72
  %v140 = vpop.f32.mrf.mxu0
  %v141 = vadd.f32 0.0, %v140
  %v142 = vpop.f32.mrf.mxu0
  %143 = vdwg.mxu0
  %vm144 = vcmask 261120
  %v145 = vsel %vm144, %v141, -inf
  %146 = vmax.xlane.f32.xlu0 %v145
  %v147 = vpop.xlane.xlu0 %146
  %v148 = vsub.f32 %v141, %v147
  %v149 = vmul.f32 %v148, 1.442695
  %v150 = vpow.pop %v149
  %v151 = vsel %vm144, %v150, 0.0
  %152 = vadd.xlane.f32.xlu0 %v151
  %v153 = vpop.xlane.xlu0 %152
  %v154 = vrcp.pop %v153
  %v155 = vmul.f32 %v150, %v154
  %156 = vst.msk [vmem:[%s2] sm:$0xff] %vm144, %v155
  // Predicated region
  $region10: #{dummy_model_forward.1} parent=0 // pred_check
    _
  $region11: #{dummy_model_forward.1} parent=0 // pred_check_branch
    %158 = sbr.rel (0) target = $region13
  $region12: #{dummy_model_forward.1} parent=0 // pred_region
    _
  $region13: #{dummy_model_forward.1} parent=0 // pred_fallthru
    _
  // Predicated region
  $region14: #{dummy_model_forward.1} parent=0 // pred_check
    _
  $region15: #{dummy_model_forward.1} parent=0 // pred_check_branch
    %160 = sbr.rel (0) target = $region17
  $region16: #{dummy_model_forward.1} parent=0 // pred_region
    _
  $region17: #{dummy_model_forward.1} parent=0 // pred_fallthru
    _

</llo_original>
